<compile_context>
chip_gen: v7x
topology: tpu7x:2x2x1
jax: 0.10.0
libtpu: 0.0.40
codegen_flags: <defaults>
</compile_context>

<pallas_src>
import functools

import jax
import jax.numpy as jnp
from jax.experimental import pallas as pl
from jax.experimental.pallas import tpu as pltpu


def _cdiv(a, b):
    return -(-a // b)


def _round_up(a, b):
    return _cdiv(a, b) * b


def _contrastive_loss_kernel(ef_ref, logits_ref, tgt_ref, out_ref, *,
                             m, true_b, inner):
    """Accumulates per-row partial sums of the two loss terms.

    ef_ref     : (TILE_B, 2)  [:, 0] = euc_dist, [:, 1] = flag   (native dtype)
    logits_ref : (TILE_B, C)  classification logits              (native dtype)
    tgt_ref    : (TILE_B, 1)  int32 class indices
    out_ref    : (TILE_B, 2)  f32, resident across the inner grid axis;
                 column 0 accumulates the contrastive term, column 1 the CE term.
    """
    core = pl.program_id(0)
    i = pl.program_id(1)
    tile_b = logits_ref.shape[0]

    # Zero the resident accumulator block at the start of this core's sweep.
    @pl.when(i == 0)
    def _init():
        out_ref[...] = jnp.zeros_like(out_ref)

    # Mask for padded rows: compare global row index against the true batch.
    row0 = (core * inner + i) * tile_b
    rows = row0 + jax.lax.broadcasted_iota(jnp.int32, (tile_b, 1), 0)
    valid = (rows < true_b).astype(jnp.float32)                     # (TILE_B, 1)

    # ---- contrastive term: (1-flag)*d^2 + flag*clamp(m-d, 0)^2 ----
    # flag is a {0,1} pair label, so the blend is a select.
    euc = ef_ref[:, 0:1].astype(jnp.float32)                        # (TILE_B, 1)
    flag = ef_ref[:, 1:2].astype(jnp.float32)                       # (TILE_B, 1)
    hinge = jnp.maximum(m - euc, 0.0)
    contr = jnp.where(flag != 0.0, hinge * hinge, euc * euc) * valid

    # ---- cross entropy per row (stable log-sum-exp in f32) ----
    logits = logits_ref[...].astype(jnp.float32)                    # (TILE_B, C)
    tgt = tgt_ref[...]                                              # (TILE_B, 1)
    mx = jnp.max(logits, axis=-1, keepdims=True)
    lse = jnp.log(jnp.sum(jnp.exp(logits - mx), axis=-1, keepdims=True)) + mx
    col = jax.lax.broadcasted_iota(jnp.int32, logits.shape, 1)
    tgt_logit = jnp.sum(jnp.where(col == tgt, logits, 0.0),
                        axis=-1, keepdims=True)
    ce = (lse - tgt_logit) * valid

    # ---- accumulate into the resident output block ----
    out_ref[:, 0:1] += contr
    out_ref[:, 1:2] += ce


def contrastive_loss(euc_dist, flag, res_class, target_class, m=2.0,
                     tile_b=None):
    """JAX/Pallas equivalent of ContrastiveLoss(m).forward(...).

    Returns (loss, loss1, loss2) as f32 scalars, matching the PyTorch module.
    """
    b = int(euc_dist.shape[0])
    c = int(res_class.shape[1])

    # ---- tile-size selection (keeps double-buffered logits tiles VMEM-safe,
    #      including on v7x's 64 MiB VMEM) ----
    itemsize = jnp.dtype(res_class.dtype).itemsize
    if tile_b is None:
        budget = 6 * 1024 * 1024  # bytes per logits pipeline buffer
        tile_b = (budget // max(1, c * itemsize)) // 8 * 8
        tile_b = max(8, min(2048, tile_b))
    tile_b = min(int(tile_b), _round_up(b, 8))
    tile_b = _round_up(tile_b, 8)

    n_tiles = _cdiv(b, tile_b)
    num_cores = 2 if n_tiles >= 2 else 1      # megacore split on v7x
    inner = _cdiv(n_tiles, num_cores)
    b_pad = num_cores * inner * tile_b
    pad = b_pad - b

    # ---- layout prep: keep native dtypes (bf16-friendly HBM transport) ----
    euc_p = jnp.pad(euc_dist.reshape(b), (0, pad))
    flag_p = jnp.pad(flag.reshape(b), (0, pad))
    ef = jnp.stack([euc_p, flag_p], axis=1)                   # (b_pad, 2)
    logits_p = jnp.pad(res_class, ((0, pad), (0, 0)))          # (b_pad, C)
    tgt_p = jnp.pad(target_class.astype(jnp.int32).reshape(b),
                    (0, pad)).reshape(b_pad, 1)                # (b_pad, 1)

    kernel = functools.partial(_contrastive_loss_kernel,
                               m=float(m), true_b=b, inner=inner)

    partial_sums = pl.pallas_call(
        kernel,
        out_shape=jax.ShapeDtypeStruct((num_cores * tile_b, 2), jnp.float32),
        grid=(num_cores, inner),
        in_specs=[
            pl.BlockSpec((tile_b, 2), lambda cc, ii: (cc * inner + ii, 0)),
            pl.BlockSpec((tile_b, c), lambda cc, ii: (cc * inner + ii, 0)),
            pl.BlockSpec((tile_b, 1), lambda cc, ii: (cc * inner + ii, 0)),
        ],
        out_specs=pl.BlockSpec((tile_b, 2), lambda cc, ii: (cc, 0)),
        compiler_params=pltpu.CompilerParams(
            dimension_semantics=("parallel", "arbitrary")),
    )(ef, logits_p, tgt_p)

    # Final scalar normalization / combine (cheap, done once on scalars).
    sums = jnp.sum(partial_sums, axis=0)                       # (2,)
    loss1 = sums[0] / b
    loss2 = sums[1] / b
    loss = 0.5 * loss1 + 0.5 * loss2
    return loss, loss1, loss2


def _reference(euc_dist, flag, res_class, target_class, m=2.0):
    """Pure-JAX reference for correctness checking."""
    loss1 = jnp.mean((1.0 - flag) * euc_dist ** 2 +
                     flag * jnp.maximum(m - euc_dist, 0.0) ** 2)
    logp = jax.nn.log_softmax(res_class, axis=-1)
    loss2 = -jnp.mean(jnp.take_along_axis(
        logp, target_class[:, None].astype(jnp.int32), axis=1))
    loss = 0.5 * loss1 + 0.5 * loss2
    return loss, loss1, loss2


if __name__ == "__main__":
    keys = jax.random.split(jax.random.PRNGKey(0), 8)

    # Small case (matches the module's intended usage scale).
    B, C = 8, 8
    euc_dist = jax.random.uniform(keys[0], (B,), jnp.float32, minval=0.0, maxval=3.0)
    flag = (jax.random.uniform(keys[1], (B,), jnp.float32) > 0.5).astype(jnp.float32)
    res_class = jax.random.normal(keys[2], (B, C), jnp.float32)
    target_class = jax.random.randint(keys[3], (B,), 0, C, dtype=jnp.int32)

    out = contrastive_loss(euc_dist, flag, res_class, target_class, m=2.0)
    jax.block_until_ready(out)
    ref = _reference(euc_dist, flag, res_class, target_class, m=2.0)
    for got, want in zip(out, ref):
        assert jnp.allclose(got, want, rtol=1e-5, atol=1e-5), (got, want)

    # Ragged case: exercises multi-tile pipelining, the 2-core split, and
    # padded-row masking (B=100 padded to 128 with TILE_B=32).
    B2, C2 = 100, 64
    euc2 = jax.random.uniform(keys[4], (B2,), jnp.float32, minval=0.0, maxval=3.0)
    flag2 = (jax.random.uniform(keys[5], (B2,), jnp.float32) > 0.5).astype(jnp.float32)
    logits2 = jax.random.normal(keys[6], (B2, C2), jnp.float32)
    tgt2 = jax.random.randint(keys[7], (B2,), 0, C2, dtype=jnp.int32)

    out2 = contrastive_loss(euc2, flag2, logits2, tgt2, m=2.0, tile_b=32)
    jax.block_until_ready(out2)
    ref2 = _reference(euc2, flag2, logits2, tgt2, m=2.0)
    for got, want in zip(out2, ref2):
        assert jnp.allclose(got, want, rtol=1e-5, atol=1e-5), (got, want)

    print("KERNEL_OK")
</pallas_src>

<mosaic_0001>
module attributes {stable_mosaic.version = 11 : i64} {
  func.func @_contrastive_loss_kernel(%arg0: i32, %arg1: i32, %arg2: memref<8x2xf32, #tpu.memory_space<vmem>>, %arg3: memref<8x8xf32, #tpu.memory_space<vmem>>, %arg4: memref<8x1xi32, #tpu.memory_space<vmem>>, %arg5: memref<8x2xf32, #tpu.memory_space<vmem>>) attributes {dimension_semantics = [#tpu.dimension_semantics<parallel>, #tpu.dimension_semantics<arbitrary>], iteration_bounds = array<i64: 1, 1>, scalar_prefetch = 0 : i64, scratch_operands = 0 : i64, tpu.core_type = #tpu.core_type<tc>, window_params = [{transform_indices = @transform_0, window_bounds = array<i64: 8, 2>}, {transform_indices = @transform_1, window_bounds = array<i64: 8, 8>}, {transform_indices = @transform_2, window_bounds = array<i64: 8, 1>}, {transform_indices = @transform_3, window_bounds = array<i64: 8, 2>}]} {
    %c0_i32 = arith.constant 0 : i32
    %0 = arith.cmpi eq, %arg1, %c0_i32 : i32
    %1 = arith.extui %0 : i1 to i32
    %c0_i32_0 = arith.constant 0 : i32
    %2 = arith.cmpi ne, %1, %c0_i32_0 : i32
    scf.if %2 {
      %cst_22 = arith.constant 0.000000e+00 : f32
      %51 = vector.broadcast %cst_22 : f32 to vector<8x2xf32>
      %c0_23 = arith.constant 0 : index
      %c0_24 = arith.constant 0 : index
      %52 = vector.load %arg5[%c0_23, %c0_24] : memref<8x2xf32, #tpu.memory_space<vmem>>, vector<8x2xf32>
      tpu.vector_store %arg5[%c0_23, %c0_24], %51 {strides = array<i32>} : memref<8x2xf32, #tpu.memory_space<vmem>>, vector<8x2xf32>,
    } else {
    }
    %c1_i32 = arith.constant 1 : i32
    %3 = arith.muli %arg0, %c1_i32 : i32
    %4 = arith.addi %3, %arg1 : i32
    %c8_i32 = arith.constant 8 : i32
    %5 = arith.muli %4, %c8_i32 : i32
    %6 = tpu.iota {dimensions = array<i32: 0>} : vector<8x1xi32>
    %7 = vector.broadcast %5 : i32 to vector<8x1xi32>
    %8 = arith.addi %7, %6 : vector<8x1xi32>
    %c8_i32_1 = arith.constant 8 : i32
    %9 = vector.broadcast %c8_i32_1 : i32 to vector<8x1xi32>
    %10 = arith.cmpi slt, %8, %9 : vector<8x1xi32>
    %11 = arith.extui %10 : vector<8x1xi1> to vector<8x1xi32>
    %12 = arith.sitofp %11 : vector<8x1xi32> to vector<8x1xf32>
    %c0 = arith.constant 0 : index
    %c0_2 = arith.constant 0 : index
    %13 = vector.load %arg2[%c0, %c0_2] : memref<8x2xf32, #tpu.memory_space<vmem>>, vector<8x1xf32>
    %c0_3 = arith.constant 0 : index
    %c1 = arith.constant 1 : index
    %14 = vector.load %arg2[%c0_3, %c1] : memref<8x2xf32, #tpu.memory_space<vmem>>, vector<8x1xf32>
    %cst = arith.constant 2.000000e+00 : f32
    %15 = vector.broadcast %cst : f32 to vector<8x1xf32>
    %16 = arith.subf %15, %13 : vector<8x1xf32>
    %cst_4 = arith.constant 0.000000e+00 : f32
    %17 = vector.broadcast %cst_4 : f32 to vector<8x1xf32>
    %18 = arith.maximumf %16, %17 : vector<8x1xf32>
    %cst_5 = arith.constant 0.000000e+00 : f32
    %19 = vector.broadcast %cst_5 : f32 to vector<8x1xf32>
    %20 = arith.cmpf one, %14, %19 : vector<8x1xf32>
    %21 = arith.mulf %18, %18 : vector<8x1xf32>
    %22 = arith.mulf %13, %13 : vector<8x1xf32>
    %23 = arith.select %20, %21, %22 : vector<8x1xi1>, vector<8x1xf32>
    %24 = arith.mulf %23, %12 : vector<8x1xf32>
    %c0_6 = arith.constant 0 : index
    %c0_7 = arith.constant 0 : index
    %25 = vector.load %arg3[%c0_6, %c0_7] : memref<8x8xf32, #tpu.memory_space<vmem>>, vector<8x8xf32>
    %c0_8 = arith.constant 0 : index
    %c0_9 = arith.constant 0 : index
    %26 = vector.load %arg4[%c0_8, %c0_9] : memref<8x1xi32, #tpu.memory_space<vmem>>, vector<8x1xi32>
    %cst_10 = arith.constant dense<0xFF800000> : vector<8xf32>
    %27 = vector.multi_reduction <maximumf>, %25, %cst_10 [1] : vector<8x8xf32> to vector<8xf32>
    %28 = vector.shape_cast %27 : vector<8xf32> to vector<8x1xf32>
    %29 = vector.broadcast %28 : vector<8x1xf32> to vector<8x8xf32>
    %30 = arith.subf %25, %29 : vector<8x8xf32>
    %31 = math.exp %30 : vector<8x8xf32>
    %cst_11 = arith.constant dense<0.000000e+00> : vector<8xf32>
    %32 = vector.multi_reduction <add>, %31, %cst_11 [1] : vector<8x8xf32> to vector<8xf32>
    %33 = vector.shape_cast %32 : vector<8xf32> to vector<8x1xf32>
    %34 = math.log %33 : vector<8x1xf32>
    %35 = arith.addf %34, %28 : vector<8x1xf32>
    %36 = tpu.iota {dimensions = array<i32: 1>} : vector<8x8xi32>
    %37 = vector.broadcast %26 : vector<8x1xi32> to vector<8x8xi32>
    %38 = arith.cmpi eq, %36, %37 : vector<8x8xi32>
    %cst_12 = arith.constant 0.000000e+00 : f32
    %39 = vector.broadcast %cst_12 : f32 to vector<8x8xf32>
    %40 = arith.select %38, %25, %39 : vector<8x8xi1>, vector<8x8xf32>
    %cst_13 = arith.constant dense<0.000000e+00> : vector<8xf32>
    %41 = vector.multi_reduction <add>, %40, %cst_13 [1] : vector<8x8xf32> to vector<8xf32>
    %42 = vector.shape_cast %41 : vector<8xf32> to vector<8x1xf32>
    %43 = arith.subf %35, %42 : vector<8x1xf32>
    %44 = arith.mulf %43, %12 : vector<8x1xf32>
    %c0_14 = arith.constant 0 : index
    %c0_15 = arith.constant 0 : index
    %45 = vector.load %arg5[%c0_14, %c0_15] : memref<8x2xf32, #tpu.memory_space<vmem>>, vector<8x1xf32>
    %46 = arith.addf %45, %24 : vector<8x1xf32>
    %c0_16 = arith.constant 0 : index
    %c0_17 = arith.constant 0 : index
    %47 = vector.load %arg5[%c0_16, %c0_17] : memref<8x2xf32, #tpu.memory_space<vmem>>, vector<8x1xf32>
    tpu.vector_store %arg5[%c0_16, %c0_17], %46 {strides = array<i32>} : memref<8x2xf32, #tpu.memory_space<vmem>>, vector<8x1xf32>,
    %c0_18 = arith.constant 0 : index
    %c1_19 = arith.constant 1 : index
    %48 = vector.load %arg5[%c0_18, %c1_19] : memref<8x2xf32, #tpu.memory_space<vmem>>, vector<8x1xf32>
    %49 = arith.addf %48, %44 : vector<8x1xf32>
    %c0_20 = arith.constant 0 : index
    %c1_21 = arith.constant 1 : index
    %50 = vector.load %arg5[%c0_20, %c1_21] : memref<8x2xf32, #tpu.memory_space<vmem>>, vector<8x1xf32>
    tpu.vector_store %arg5[%c0_20, %c1_21], %49 {strides = array<i32>} : memref<8x2xf32, #tpu.memory_space<vmem>>, vector<8x1xf32>,
    return
  }
  func.func @transform_0(%arg0: i32, %arg1: i32) -> (i32, i32) {
    %c1_i32 = arith.constant 1 : i32
    %0 = arith.muli %arg0, %c1_i32 : i32
    %1 = arith.addi %0, %arg1 : i32
    %c0_i32 = arith.constant 0 : i32
    %c0_i32_0 = arith.constant 0 : i32
    return %1, %c0_i32 : i32, i32
  }
  func.func @transform_1(%arg0: i32, %arg1: i32) -> (i32, i32) {
    %c1_i32 = arith.constant 1 : i32
    %0 = arith.muli %arg0, %c1_i32 : i32
    %1 = arith.addi %0, %arg1 : i32
    %c0_i32 = arith.constant 0 : i32
    %c0_i32_0 = arith.constant 0 : i32
    return %1, %c0_i32 : i32, i32
  }
  func.func @transform_2(%arg0: i32, %arg1: i32) -> (i32, i32) {
    %c1_i32 = arith.constant 1 : i32
    %0 = arith.muli %arg0, %c1_i32 : i32
    %1 = arith.addi %0, %arg1 : i32
    %c0_i32 = arith.constant 0 : i32
    %c0_i32_0 = arith.constant 0 : i32
    return %1, %c0_i32 : i32, i32
  }
  func.func @transform_3(%arg0: i32, %arg1: i32) -> (i32, i32) {
    %c0_i32 = arith.constant 0 : i32
    %c0_i32_0 = arith.constant 0 : i32
    return %arg0, %c0_i32 : i32, i32
  }
}

</mosaic_0001>

<llo_original>
// kernel: tpu_custom_call.1
$region0: #{tpu_custom_call.1}
  #allocation0 [shape = 'u32[]', space=smem, size = 0x4, offset = 0x4, fixed_abs, tag = 'smem constant byte address 0x4 - core index']
  #allocation1 [shape = 'u32[144,128]{1,0:T(1,128)}', space=vmem, size = 0x12000, scoped, tag = 'internal scratch']
  %s0 = inlined_call_operand.vmem [shape: f32[8,2], index: 0, kind: input, shape index: {}]
  %s1 = inlined_call_operand.vmem [shape: f32[8,8], index: 1, kind: input, shape index: {}]
  %s2 = inlined_call_operand.vmem [shape: s32[8,1], index: 2, kind: input, shape index: {}]
  %s3 = inlined_call_operand.vmem [shape: f32[8,2], index: 3, kind: output, shape index: {}]
  %s4 = sld [smem:[#allocation0]]
  $region26: #{tpu_custom_call.1} parent=0
    _
  %s6 = ssub.s32 1, %s4
  %s7 = scalar_select 0, %s6, %s4
  // Predicated region
  $region2: #{tpu_custom_call.1} parent=0 // pred_check
    _
  $region3: #{tpu_custom_call.1} parent=0 // pred_check_branch
    %9 = sbr.rel (0) target = $region5
  $region4: #{tpu_custom_call.1} parent=0 // pred_region
    %s10 = sadd.s32 0, 0
    %p11 = scmp.lt.s32.totalorder %s10, 0
    %s12 = scalar_select %p11, %s10, 0
    %s13 = smul.addr %s12, 8
    %s14 = scalar_lea.vmem %s0, %s13
    %s15 = sadd.s32 0, 0
  $region5: #{tpu_custom_call.1} parent=0 // pred_fallthru
    _
  // Predicated region
  $region6: #{tpu_custom_call.1} parent=0 // pred_check
    _
  $region7: #{tpu_custom_call.1} parent=0 // pred_check_branch
    %17 = sbr.rel (0) target = $region9
  $region8: #{tpu_custom_call.1} parent=0 // pred_region
    %s18 = sadd.s32 0, 0
    %p19 = scmp.lt.s32.totalorder %s18, 0
    %s20 = scalar_select %p19, %s18, 0
    %s21 = smul.addr %s20, 8
    %s22 = scalar_lea.vmem %s1, %s21
    %s23 = sadd.s32 0, 0
  $region9: #{tpu_custom_call.1} parent=0 // pred_fallthru
    _
  // Predicated region
  $region10: #{tpu_custom_call.1} parent=0 // pred_check
    _
  $region11: #{tpu_custom_call.1} parent=0 // pred_check_branch
    %25 = sbr.rel (0) target = $region13
  $region12: #{tpu_custom_call.1} parent=0 // pred_region
    %s26 = sadd.s32 0, 0
    %p27 = scmp.lt.s32.totalorder %s26, 0
    %s28 = scalar_select %p27, %s26, 0
    %s29 = smul.addr %s28, 8
    %s30 = scalar_lea.vmem %s2, %s29
    %s31 = sadd.s32 0, 0
  $region13: #{tpu_custom_call.1} parent=0 // pred_fallthru
    _
  %s32 = sadd.s32 0, 0
  %p33 = scmp.lt.s32.totalorder %s32, 0
  %s34 = scalar_select %p33, %s32, 0
  %s35 = smul.addr %s34, 8
  %s36 = scalar_lea.vmem %s0, %s35
  %s37 = sadd.s32 0, 0
  %p38 = scmp.lt.s32.totalorder %s37, 0
  %s39 = scalar_select %p38, %s37, 0
  %s40 = smul.addr %s39, 8
  %s41 = scalar_lea.vmem %s1, %s40
  %s42 = sadd.s32 0, 0
  %p43 = scmp.lt.s32.totalorder %s42, 0
  %s44 = scalar_select %p43, %s42, 0
  %s45 = smul.addr %s44, 8
  %s46 = scalar_lea.vmem %s2, %s45
  %s47 = sadd.s32 0, 0
  %p48 = scmp.lt.s32.totalorder %s47, 0
  %s49 = scalar_select %p48, %s47, 0
  %s50 = smul.addr %s49, 8
  %s51 = scalar_lea.vmem %s0, %s50
  %s52 = sadd.s32 0, 0
  %s53 = sadd.s32 0, 0
  %p54 = scmp.lt.s32.totalorder %s53, 0
  %s55 = scalar_select %p54, %s53, 0
  %s56 = smul.addr %s55, 8
  %s57 = scalar_lea.vmem %s1, %s56
  %s58 = sadd.s32 0, 0
  %s59 = sadd.s32 0, 0
  %p60 = scmp.lt.s32.totalorder %s59, 0
  %s61 = scalar_select %p60, %s59, 0
  %s62 = smul.addr %s61, 8
  %s63 = scalar_lea.vmem %s2, %s62
  %s64 = sadd.s32 0, 0
  %p65 = scmp.eq.s32.totalorder 0, 0
  // Predicated region
  $region14: #{tpu_custom_call.1} parent=0 // pred_check
    %p66 = pneg %p65
  $region15: #{tpu_custom_call.1} parent=0 // pred_check_branch
    %68 = sbr.rel (%p66) target = $region17
  $region16: #{tpu_custom_call.1} parent=0 // pred_region
    %vm69 = vcmask 15360
    %70 = vst.msk [vmem:[%s3] sm:$0xff] %vm69, 0.0
  $region17: #{tpu_custom_call.1} parent=0 // pred_fallthru
    _
  %s71 = sadd.s32 0, 0
  %s72 = smul.u32 %s71, 8
  %v73 = vlaneseq
  %v74 = vshrl.u32 %v73, 7
  %v75 = vstv %s72
  %v76 = vadd.s32 %v75, %v74
  %vm77 = vcmp.lt.s32.totalorder %v76, 8
  %v78 = vsel %vm77, 1, 0
  %v79 = vcvt.s32.f32 %v78
  %v80 = vld [vmem:[%s51] sm:$0xff]
  %v81 = vsub.f32 2.0, %v80
  %v82 = vmax.f32 %v81, 0.0
  %vm83 = vcmp.ne.f32.partialorder %v80, 0.0
  %v84 = vmul.f32 %v82, %v82
  %v85 = vmul.f32 %v80, %v80
  %87 = vrot.lane.b32.xlu0 %v84, 1
  %v88 = vpop.permute.xlu0 %87
  %91 = vrot.lane.b32.xlu0 %v85, 1
  %v92 = vpop.permute.xlu0 %91
  %v94 = vsel %vm83, %v88, %v92
  %v95 = vmul.f32 %v94, %v79
  %v96 = vld [vmem:[%s57] sm:$0xff]
  %v97 = vld [vmem:[%s63] sm:$0xff]
  %vm98 = vcmask 64512
  %v99 = vsel %vm98, %v96, -inf
  %100 = vmax.xlane.f32.xlu0 %v99
  %v101 = vpop.xlane.xlu0 %100
  %v102 = vsub.f32 %v96, %v101
  %v103 = vmul.f32 %v102, 1.442695
  %v104 = vpow.pop %v103
  %v105 = vsel %vm98, %v104, 0.0
  %106 = vadd.xlane.f32.xlu0 %v105
  %v107 = vpop.xlane.xlu0 %106
  %v108 = vlog2.pop %v107
  %v109 = vmul.f32 %v108, 0.6931472
  %v110 = vadd.f32 %v109, %v101
  %v111 = vlaneseq
  %v112 = vand.u32 %v111, 127
  %113 = vset.pattern.permute.xlu0 0
  %114 = vperm.xlu0 %113, %v97
  %v115 = vpop.permute.xlu0 %114
  %vm116 = vcmp.eq.s32.totalorder %v112, %v115
  %v117 = vsel %vm116, %v96, 0.0
  %v118 = vsel %vm98, %v117, 0.0
  %119 = vadd.xlane.f32.xlu0 %v118
  %v120 = vpop.xlane.xlu0 %119
  %v121 = vsub.f32 %v110, %v120
  %v122 = vmul.f32 %v121, %v79
  %v123 = vld [vmem:[%s3] sm:$0xff]
  %125 = vrot.lane.b32.xlu0 %v95, 127
  %v126 = vpop.permute.xlu0 %125
  %v128 = vadd.f32 %v123, %v126
  %vm129 = vcmask 7168
  %130 = vst.msk [vmem:[%s3] sm:$0xff] %vm129, %v128
  %v131 = vld [vmem:[%s3] sm:$0xff]
  %v132 = vadd.f32 %v131, %v122
  %vm133 = vcmask 15368
  %134 = vst.msk [vmem:[%s3] sm:$0xff] %vm133, %v132
  // Predicated region
  $region18: #{tpu_custom_call.1} parent=0 // pred_check
    _
  $region19: #{tpu_custom_call.1} parent=0 // pred_check_branch
    %136 = sbr.rel (0) target = $region21
  $region20: #{tpu_custom_call.1} parent=0 // pred_region
    _
  $region21: #{tpu_custom_call.1} parent=0 // pred_fallthru
    _
  // Predicated region
  $region22: #{tpu_custom_call.1} parent=0 // pred_check
    _
  $region23: #{tpu_custom_call.1} parent=0 // pred_check_branch
    %138 = sbr.rel (0) target = $region25
  $region24: #{tpu_custom_call.1} parent=0 // pred_region
    _
  $region25: #{tpu_custom_call.1} parent=0 // pred_fallthru
    _

</llo_original>
